<compile_context>
chip_gen: v5e
topology: v5e:2x2
jax: 0.10.0
libtpu: 0.0.40
codegen_flags: <defaults>
</compile_context>

<pallas_src>
import functools
import numpy as np
import jax
import jax.numpy as jnp
from jax.experimental import pallas as pl
from jax.experimental.pallas import tpu as pltpu

_LANE = 128


def _fusion_mlp_kernel(x_ref, *refs, n_layers):
    """Fused 1x1-Conv1d + ReLU chain on one [C_in, n_tile] slab."""
    o_ref = refs[-1]
    wb_refs = refs[:-1]          # interleaved: w0, b0, w1, b1, ...

    h = x_ref[0]                 # [C_in, n_tile]
    for i in range(n_layers):    # static unroll (n_layers is a Python int)
        w = wb_refs[2 * i][...]        # [C_out_i, C_in_i]
        b = wb_refs[2 * i + 1][...]    # [C_out_i, 1]
        # 1x1 Conv1d == channel matmul; contract last axis of W with first axis
        # of h -> straight MXU push, f32 accumulation regardless of I/O dtype.
        h = jnp.dot(w, h.astype(w.dtype), preferred_element_type=jnp.float32)
        h = jnp.maximum(h + b.astype(jnp.float32), 0.0)   # bias + ReLU in f32 (VPU)
    o_ref[0] = h.astype(o_ref.dtype)


def msfa_forward_pallas(x, weights, biases, *, n_tile=4096, out_dtype=None):
    """Forward of MultiScaleFeatureAggregation (== mlp_fusion(x)).

    x        : [B, C_in, N]            (f32 or bf16)
    weights  : list of [C_out_i, C_in_i] (Conv1d kernel-1 weights)
    biases   : list of [C_out_i]
    out_dtype: output dtype (default: x.dtype). Use bf16 to halve output HBM traffic.
    returns  : [B, C_out_last, N]
    """
    B, c_in, N = x.shape
    n_layers = len(weights)
    c_out = weights[-1].shape[0]
    out_dtype = x.dtype if out_dtype is None else out_dtype

    # ---- N tiling: biggest lane-dense tile (mem-bound kernel), ragged N via cdiv.
    if N <= n_tile:
        n_tile = N                                  # single full-extent block along N
    else:
        n_tile = max(_LANE, (n_tile // _LANE) * _LANE)
    n_steps = pl.cdiv(N, n_tile)

    # v7x has 2 TensorCores sharded over "parallel" axes; avoid a 1x1 grid.
    if B * n_steps < 2 and N >= 2 * _LANE:
        n_tile = ((pl.cdiv(N, 2) + _LANE - 1) // _LANE) * _LANE
        n_steps = pl.cdiv(N, n_tile)

    # ---- VMEM budget (double-buffered x/out blocks + resident weights) & cost hint.
    x_itemsize = np.dtype(x.dtype).itemsize
    o_itemsize = np.dtype(out_dtype).itemsize
    w_bytes = sum(int(w.size) * np.dtype(w.dtype).itemsize
                  + int(b.size) * np.dtype(b.dtype).itemsize
                  for w, b in zip(weights, biases))
    x_blk = c_in * n_tile * x_itemsize
    o_blk = c_out * n_tile * o_itemsize
    vmem_need = 2 * (x_blk + o_blk) + 2 * w_bytes + (2 << 20)
    # Keep <= 48 MiB so the same choice is safe on v7x (64 MiB physical VMEM).
    vmem_limit = int(min(48 << 20, max(32 << 20, int(1.5 * vmem_need))))

    flops = 2 * B * N * sum(int(w.shape[0]) * int(w.shape[1]) for w in weights)
    bytes_accessed = B * N * c_in * x_itemsize + B * N * c_out * o_itemsize + w_bytes
    cost = pl.CostEstimate(flops=flops, transcendentals=0,
                           bytes_accessed=bytes_accessed)

    kernel = functools.partial(_fusion_mlp_kernel, n_layers=n_layers)

    # Interleaved operands: x, w0, b0, w1, b1, ...
    operands = [x]
    for w, bvec in zip(weights, biases):
        co, _ = w.shape
        operands.append(w)
        operands.append(bvec.reshape(co, 1))

    def _call(single_buffer_weights):
        if single_buffer_weights:
            # Constant index_map -> weights are never re-fetched; a single VMEM
            # buffer is enough (saves the useless second buffer + prologue DMA).
            wb_kwargs = dict(pipeline_mode=pl.Buffered(1))
        else:
            wb_kwargs = {}
        in_specs = [pl.BlockSpec((1, c_in, n_tile), lambda b, n: (b, 0, n))]
        for w in weights:
            co, ci = w.shape
            in_specs.append(pl.BlockSpec((co, ci), lambda b, n: (0, 0), **wb_kwargs))
            in_specs.append(pl.BlockSpec((co, 1), lambda b, n: (0, 0), **wb_kwargs))
        return pl.pallas_call(
            kernel,
            out_shape=jax.ShapeDtypeStruct((B, c_out, N), out_dtype),
            grid_spec=pltpu.PrefetchScalarGridSpec(
                num_scalar_prefetch=0,
                grid=(B, n_steps),
                in_specs=in_specs,
                out_specs=pl.BlockSpec((1, c_out, n_tile), lambda b, n: (b, 0, n)),
            ),
            compiler_params=pltpu.CompilerParams(
                dimension_semantics=("parallel", "parallel"),
                vmem_limit_bytes=vmem_limit),
            cost_estimate=cost,
        )(*operands)

    try:
        return _call(single_buffer_weights=True)
    except Exception:
        # pl.Buffered(1) not supported on this jax version -> default buffering.
        return _call(single_buffer_weights=False)


def msfa_forward_ref(x, weights, biases):
    """Pure-numpy reference mirroring mlp_fusion: (Conv1d(k=1) -> ReLU)* ."""
    x = np.asarray(x, dtype=np.float64)
    outs = []
    for b in range(x.shape[0]):
        h = x[b]
        for w, bias in zip(weights, biases):
            h = np.maximum(np.asarray(w, np.float64) @ h
                           + np.asarray(bias, np.float64)[:, None], 0.0)
        outs.append(h)
    return np.stack(outs)


if __name__ == "__main__":
    key = jax.random.PRNGKey(0)

    # Small shapes consistent with the module: x is [B, channel_in, N] points,
    # mlp_fushion = [32, 64] fusion layers.
    B, C_IN, N = 2, 8, 256
    MLP_FUSION = [32, 64]

    ks = jax.random.split(key, 1 + 2 * len(MLP_FUSION))
    x = jax.random.normal(ks[0], (B, C_IN, N), dtype=jnp.float32)

    weights, biases = [], []
    pre = C_IN
    for i, c_out in enumerate(MLP_FUSION):
        weights.append(0.1 * jax.random.normal(ks[1 + 2 * i], (c_out, pre),
                                               dtype=jnp.float32))
        biases.append(0.1 * jax.random.normal(ks[2 + 2 * i], (c_out,),
                                              dtype=jnp.float32))
        pre = c_out

    ref = msfa_forward_ref(np.asarray(x),
                           [np.asarray(w) for w in weights],
                           [np.asarray(b) for b in biases])

    # 1) f32 path (numerically tight check).
    out = jax.block_until_ready(msfa_forward_pallas(x, weights, biases))
    np.testing.assert_allclose(np.asarray(out), ref, rtol=1e-5, atol=1e-5)

    # 2) bf16-I/O path: ~45% less HBM traffic on this bandwidth-bound kernel
    #    (f32 MXU accumulation kept inside the kernel).
    out_bf16 = jax.block_until_ready(
        msfa_forward_pallas(x.astype(jnp.bfloat16),
                            [w.astype(jnp.bfloat16) for w in weights],
                            biases, out_dtype=jnp.bfloat16))
    np.testing.assert_allclose(np.asarray(out_bf16, dtype=np.float32), ref,
                               rtol=5e-2, atol=5e-2)

    print("KERNEL_OK")
</pallas_src>

<mosaic_0001>
module attributes {stable_mosaic.version = 11 : i64} {
  func.func @_fusion_mlp_kernel(%arg0: i32, %arg1: i32, %arg2: memref<1x8x256xf32, #tpu.memory_space<vmem>>, %arg3: memref<32x8xf32, #tpu.memory_space<vmem>>, %arg4: memref<32x1xf32, #tpu.memory_space<vmem>>, %arg5: memref<64x32xf32, #tpu.memory_space<vmem>>, %arg6: memref<64x1xf32, #tpu.memory_space<vmem>>, %arg7: memref<1x64x256xf32, #tpu.memory_space<vmem>>) attributes {dimension_semantics = [#tpu.dimension_semantics<parallel>, #tpu.dimension_semantics<parallel>], iteration_bounds = array<i64: 2, 1>, scalar_prefetch = 0 : i64, scratch_operands = 0 : i64, tpu.core_type = #tpu.core_type<tc>, window_params = [{transform_indices = @transform_0, window_bounds = array<i64: 1, 8, 256>}, {pipeline_mode = #tpu.pipeline_mode<synchronous>, transform_indices = @transform_1, window_bounds = array<i64: 32, 8>}, {pipeline_mode = #tpu.pipeline_mode<synchronous>, transform_indices = @transform_2, window_bounds = array<i64: 32, 1>}, {pipeline_mode = #tpu.pipeline_mode<synchronous>, transform_indices = @transform_3, window_bounds = array<i64: 64, 32>}, {pipeline_mode = #tpu.pipeline_mode<synchronous>, transform_indices = @transform_4, window_bounds = array<i64: 64, 1>}, {transform_indices = @transform_5, window_bounds = array<i64: 1, 64, 256>}]} {
    %c0 = arith.constant 0 : index
    %c0_0 = arith.constant 0 : index
    %c0_1 = arith.constant 0 : index
    %0 = vector.load %arg2[%c0, %c0_0, %c0_1] : memref<1x8x256xf32, #tpu.memory_space<vmem>>, vector<1x8x256xf32>
    %1 = vector.shape_cast %0 : vector<1x8x256xf32> to vector<8x256xf32>
    %c0_2 = arith.constant 0 : index
    %c0_3 = arith.constant 0 : index
    %2 = vector.load %arg3[%c0_2, %c0_3] : memref<32x8xf32, #tpu.memory_space<vmem>>, vector<32x8xf32>
    %c0_4 = arith.constant 0 : index
    %c0_5 = arith.constant 0 : index
    %3 = vector.load %arg4[%c0_4, %c0_5] : memref<32x1xf32, #tpu.memory_space<vmem>>, vector<32x1xf32>
    %cst = arith.constant dense<0.000000e+00> : vector<32x256xf32>
    %4 = tpu.matmul %2, %1, %cst {dimension_numbers = #tpu.dot_dimension_numbers<[1], [0], [0], [1], [0, 0, 1, 1], [], []>} : vector<32x8xf32>, vector<8x256xf32>, vector<32x256xf32> -> vector<32x256xf32>
    %5 = vector.broadcast %3 : vector<32x1xf32> to vector<32x256xf32>
    %6 = arith.addf %4, %5 : vector<32x256xf32>
    %cst_6 = arith.constant 0.000000e+00 : f32
    %7 = vector.broadcast %cst_6 : f32 to vector<32x256xf32>
    %8 = arith.maximumf %6, %7 : vector<32x256xf32>
    %c0_7 = arith.constant 0 : index
    %c0_8 = arith.constant 0 : index
    %9 = vector.load %arg5[%c0_7, %c0_8] : memref<64x32xf32, #tpu.memory_space<vmem>>, vector<64x32xf32>
    %c0_9 = arith.constant 0 : index
    %c0_10 = arith.constant 0 : index
    %10 = vector.load %arg6[%c0_9, %c0_10] : memref<64x1xf32, #tpu.memory_space<vmem>>, vector<64x1xf32>
    %cst_11 = arith.constant dense<0.000000e+00> : vector<64x256xf32>
    %11 = tpu.matmul %9, %8, %cst_11 {dimension_numbers = #tpu.dot_dimension_numbers<[1], [0], [0], [1], [0, 0, 1, 1], [], []>} : vector<64x32xf32>, vector<32x256xf32>, vector<64x256xf32> -> vector<64x256xf32>
    %12 = vector.broadcast %10 : vector<64x1xf32> to vector<64x256xf32>
    %13 = arith.addf %11, %12 : vector<64x256xf32>
    %cst_12 = arith.constant 0.000000e+00 : f32
    %14 = vector.broadcast %cst_12 : f32 to vector<64x256xf32>
    %15 = arith.maximumf %13, %14 : vector<64x256xf32>
    %c0_13 = arith.constant 0 : index
    %c0_14 = arith.constant 0 : index
    %c0_15 = arith.constant 0 : index
    %16 = vector.load %arg7[%c0_13, %c0_14, %c0_15] : memref<1x64x256xf32, #tpu.memory_space<vmem>>, vector<1x64x256xf32>
    %17 = vector.shape_cast %16 : vector<1x64x256xf32> to vector<64x256xf32>
    %18 = vector.shape_cast %15 : vector<64x256xf32> to vector<1x64x256xf32>
    tpu.vector_store %arg7[%c0_13, %c0_14, %c0_15], %18 {strides = array<i32>} : memref<1x64x256xf32, #tpu.memory_space<vmem>>, vector<1x64x256xf32>,
    return
  }
  func.func @transform_0(%arg0: i32, %arg1: i32) -> (i32, i32, i32) {
    %c0_i32 = arith.constant 0 : i32
    %c0_i32_0 = arith.constant 0 : i32
    return %arg0, %c0_i32, %arg1 : i32, i32, i32
  }
  func.func @transform_1(%arg0: i32, %arg1: i32) -> (i32, i32) {
    %c0_i32 = arith.constant 0 : i32
    %c0_i32_0 = arith.constant 0 : i32
    %c0_i32_1 = arith.constant 0 : i32
    return %c0_i32, %c0_i32_0 : i32, i32
  }
  func.func @transform_2(%arg0: i32, %arg1: i32) -> (i32, i32) {
    %c0_i32 = arith.constant 0 : i32
    %c0_i32_0 = arith.constant 0 : i32
    %c0_i32_1 = arith.constant 0 : i32
    return %c0_i32, %c0_i32_0 : i32, i32
  }
  func.func @transform_3(%arg0: i32, %arg1: i32) -> (i32, i32) {
    %c0_i32 = arith.constant 0 : i32
    %c0_i32_0 = arith.constant 0 : i32
    %c0_i32_1 = arith.constant 0 : i32
    return %c0_i32, %c0_i32_0 : i32, i32
  }
  func.func @transform_4(%arg0: i32, %arg1: i32) -> (i32, i32) {
    %c0_i32 = arith.constant 0 : i32
    %c0_i32_0 = arith.constant 0 : i32
    %c0_i32_1 = arith.constant 0 : i32
    return %c0_i32, %c0_i32_0 : i32, i32
  }
  func.func @transform_5(%arg0: i32, %arg1: i32) -> (i32, i32, i32) {
    %c0_i32 = arith.constant 0 : i32
    %c0_i32_0 = arith.constant 0 : i32
    return %arg0, %c0_i32, %arg1 : i32, i32, i32
  }
}

module attributes {stable_mosaic.version = 11 : i64} {
  func.func @_fusion_mlp_kernel(%arg0: i32, %arg1: i32, %arg2: memref<1x8x256xf32, #tpu.memory_space<vmem>>, %arg3: memref<32x8xf32, #tpu.memory_space<vmem>>, %arg4: memref<32x1xf32, #tpu.memory_space<vmem>>, %arg5: memref<64x32xf32, #tpu.memory_space<vmem>>, %arg6: memref<64x1xf32, #tpu.memory_space<vmem>>, %arg7: memref<1x64x256xf32, #tpu.memory_space<vmem>>) attributes {dimension_semantics = [#tpu.dimension_semantics<parallel>, #tpu.dimension_semantics<parallel>], iteration_bounds = array<i64: 2, 1>, scalar_prefetch = 0 : i64, scratch_operands = 0 : i64, tpu.core_type = #tpu.core_type<tc>, window_params = [{transform_indices = @transform_0, window_bounds = array<i64: 1, 8, 256>}, {pipeline_mode = #tpu.pipeline_mode<synchronous>, transform_indices = @transform_1, window_bounds = array<i64: 32, 8>}, {pipeline_mode = #tpu.pipeline_mode<synchronous>, transform_indices = @transform_2, window_bounds = array<i64: 32, 1>}, {pipeline_mode = #tpu.pipeline_mode<synchronous>, transform_indices = @transform_3, window_bounds = array<i64: 64, 32>}, {pipeline_mode = #tpu.pipeline_mode<synchronous>, transform_indices = @transform_4, window_bounds = array<i64: 64, 1>}, {transform_indices = @transform_5, window_bounds = array<i64: 1, 64, 256>}]} {
    %c0 = arith.constant 0 : index
    %c0_0 = arith.constant 0 : index
    %c0_1 = arith.constant 0 : index
    %0 = vector.load %arg2[%c0, %c0_0, %c0_1] : memref<1x8x256xf32, #tpu.memory_space<vmem>>, vector<1x8x256xf32>
    %1 = vector.shape_cast %0 : vector<1x8x256xf32> to vector<8x256xf32>
    %c0_2 = arith.constant 0 : index
    %c0_3 = arith.constant 0 : index
    %2 = vector.load %arg3[%c0_2, %c0_3] : memref<32x8xf32, #tpu.memory_space<vmem>>, vector<32x8xf32>
    %c0_4 = arith.constant 0 : index
    %c0_5 = arith.constant 0 : index
    %3 = vector.load %arg4[%c0_4, %c0_5] : memref<32x1xf32, #tpu.memory_space<vmem>>, vector<32x1xf32>
    %cst = arith.constant dense<0.000000e+00> : vector<32x256xf32>
    %4 = tpu.matmul %2, %1, %cst {dimension_numbers = #tpu.dot_dimension_numbers<[1], [0], [0], [1], [0, 0, 1, 1], [], []>} : vector<32x8xf32>, vector<8x256xf32>, vector<32x256xf32> -> vector<32x256xf32>
    %5 = vector.broadcast %3 : vector<32x1xf32> to vector<32x256xf32>
    %6 = arith.addf %4, %5 : vector<32x256xf32>
    %cst_6 = arith.constant 0.000000e+00 : f32
    %7 = vector.broadcast %cst_6 : f32 to vector<32x256xf32>
    %8 = arith.maximumf %6, %7 : vector<32x256xf32>
    %c0_7 = arith.constant 0 : index
    %c0_8 = arith.constant 0 : index
    %9 = vector.load %arg5[%c0_7, %c0_8] : memref<64x32xf32, #tpu.memory_space<vmem>>, vector<64x32xf32>
    %c0_9 = arith.constant 0 : index
    %c0_10 = arith.constant 0 : index
    %10 = vector.load %arg6[%c0_9, %c0_10] : memref<64x1xf32, #tpu.memory_space<vmem>>, vector<64x1xf32>
    %cst_11 = arith.constant dense<0.000000e+00> : vector<64x256xf32>
    %11 = tpu.matmul %9, %8, %cst_11 {dimension_numbers = #tpu.dot_dimension_numbers<[1], [0], [0], [1], [0, 0, 1, 1], [], []>} : vector<64x32xf32>, vector<32x256xf32>, vector<64x256xf32> -> vector<64x256xf32>
    %12 = vector.broadcast %10 : vector<64x1xf32> to vector<64x256xf32>
    %13 = arith.addf %11, %12 : vector<64x256xf32>
    %cst_12 = arith.constant 0.000000e+00 : f32
    %14 = vector.broadcast %cst_12 : f32 to vector<64x256xf32>
    %15 = arith.maximumf %13, %14 : vector<64x256xf32>
    %c0_13 = arith.constant 0 : index
    %c0_14 = arith.constant 0 : index
    %c0_15 = arith.constant 0 : index
    %16 = vector.load %arg7[%c0_13, %c0_14, %c0_15] : memref<1x64x256xf32, #tpu.memory_space<vmem>>, vector<1x64x256xf32>
    %17 = vector.shape_cast %16 : vector<1x64x256xf32> to vector<64x256xf32>
    %18 = vector.shape_cast %15 : vector<64x256xf32> to vector<1x64x256xf32>
    tpu.vector_store %arg7[%c0_13, %c0_14, %c0_15], %18 {strides = array<i32>} : memref<1x64x256xf32, #tpu.memory_space<vmem>>, vector<1x64x256xf32>,
    return
  }
  func.func @transform_0(%arg0: i32, %arg1: i32) -> (i32, i32, i32) {
    %c0_i32 = arith.constant 0 : i32
    %c0_i32_0 = arith.constant 0 : i32
    return %arg0, %c0_i32, %arg1 : i32, i32, i32
  }
  func.func @transform_1(%arg0: i32, %arg1: i32) -> (i32, i32) {
    %c0_i32 = arith.constant 0 : i32
    %c0_i32_0 = arith.constant 0 : i32
    %c0_i32_1 = arith.constant 0 : i32
    return %c0_i32, %c0_i32_0 : i32, i32
  }
  func.func @transform_2(%arg0: i32, %arg1: i32) -> (i32, i32) {
    %c0_i32 = arith.constant 0 : i32
    %c0_i32_0 = arith.constant 0 : i32
    %c0_i32_1 = arith.constant 0 : i32
    return %c0_i32, %c0_i32_0 : i32, i32
  }
  func.func @transform_3(%arg0: i32, %arg1: i32) -> (i32, i32) {
    %c0_i32 = arith.constant 0 : i32
    %c0_i32_0 = arith.constant 0 : i32
    %c0_i32_1 = arith.constant 0 : i32
    return %c0_i32, %c0_i32_0 : i32, i32
  }
  func.func @transform_4(%arg0: i32, %arg1: i32) -> (i32, i32) {
    %c0_i32 = arith.constant 0 : i32
    %c0_i32_0 = arith.constant 0 : i32
    %c0_i32_1 = arith.constant 0 : i32
    return %c0_i32, %c0_i32_0 : i32, i32
  }
  func.func @transform_5(%arg0: i32, %arg1: i32) -> (i32, i32, i32) {
    %c0_i32 = arith.constant 0 : i32
    %c0_i32_0 = arith.constant 0 : i32
    return %arg0, %c0_i32, %arg1 : i32, i32, i32
  }
}

</mosaic_0001>

<llo_original>
// kernel: tpu_custom_call.1
$region0: #{tpu_custom_call.1}
  #allocation0 [shape = 'u32[]', space=smem, size = 0x4, offset = 0x4, fixed_abs, tag = 'smem constant byte address 0x4 - core index']
  #allocation1 [shape = 'u32[72,128]{1,0:T(1,128)}', space=vmem, size = 0x9000, scoped, tag = 'internal scratch']
  %s0 = inlined_call_operand.vmem [shape: f32[2,8,256], index: 0, kind: input, shape index: {}]
  %s1 = inlined_call_operand.vmem [shape: f32[32,8], index: 1, kind: input, shape index: {}]
  %s2 = inlined_call_operand.vmem [shape: f32[32,1], index: 2, kind: input, shape index: {}]
  %s3 = inlined_call_operand.vmem [shape: f32[64,32], index: 3, kind: input, shape index: {}]
  %s4 = inlined_call_operand.vmem [shape: f32[64,1], index: 4, kind: input, shape index: {}]
  %s5 = inlined_call_operand.hbm [shape: f32[2,64,256], index: 5, kind: output, shape index: {}]
  %s6 = sld [smem:[#allocation0]]
  $region53: #{tpu_custom_call.1} parent=0
    _
  %s8 = ssub.s32 1, %s6
  %s9 = scalar_select 0, %s8, %s6
  $region1: #{tpu_custom_call.1} parent=0
    #allocation2 [shape = 'u8[131072]{0}', space=vmem, size = 0x20000, scoped, tag = 'output window, operand 0']
    #allocation3 [shape = 's32[2]{0}', space=sflag, size = 0x8, scoped, tag = 'scoped memory for tpu_custom_call.1']
    %10 = vsyncpa [#allocation3], 0
    %s11 = scalar_lea.sflag [#allocation3], 1
    %12 = vsyncpa %s11, 0
    loop: start=0, step=1, limit=4
    $region2: #{tpu_custom_call.1} parent=1 // loop_pre_header
      _
    $region3: #{tpu_custom_call.1} parent=1 // loop_header
      %s14 = sphi 0, %s18
      %p15 = scmp.ge.s32.totalorder %s14, 4
      %s21 = sphi 0, %s33
      %s22 = sphi 0, %s29
      %s23 = sphi 0, %s21
      %s24 = sphi 0, %s22
      %s25 = sphi 0, %s23
      %s26 = sphi 0, %s24
      %s38 = sphi 0, %s40
      %s41 = sphi 0, %s38
      %s42 = sphi 0, %s41
      %s58 = sphi 0, %s42
      %s62 = sphi 0, %s62
      %s64 = sphi 0, %s62
      %s65 = sphi 0, %s64
      %s79 = sphi 0, %s65
      %s83 = sphi 0, %s83
      %s85 = sphi 0, %s83
      %s86 = sphi 0, %s85
      %s100 = sphi 0, %s86
      %s104 = sphi 0, %s104
      %s106 = sphi 0, %s104
      %s107 = sphi 0, %s106
      %s121 = sphi 0, %s107
      %s125 = sphi 0, %s125
      %s127 = sphi 0, %s125
      %s128 = sphi 0, %s127
      %s142 = sphi 0, %s128
      %s150 = sphi 0, %s152
      %s153 = sphi 0, %s150
      %s154 = sphi 0, %s153
      %s170 = sphi 0, %s154
    $region4: #{tpu_custom_call.1} parent=1 // loop_header_branch
      %17 = sbr.rel (%p15) target = $region8
    $region5: #{tpu_custom_call.1} parent=1 // loop_body
      %s19 = ssub.s32 %s14, 1
      %s20 = ssub.s32 %s14, 2
      %s27 = sadd.s32 1, %s22
      %p28 = scmp.ge.s32.totalorder %s27, 1
      %s29 = scalar_select %p28, 0, %s27
      %s30 = sadd.s32 1, %s21
      %s31 = scalar_select %p28, %s30, %s21
      %p32 = scmp.ge.s32.totalorder %s31, 2
      %s33 = scalar_select %p32, 0, %s31
      %s34 = ssub.s32 %s21, %s33
      %s35 = ssub.s32 %s22, %s29
      %s36 = sor.u32 %s34, %s35
      %p37 = scmp.eq.s32.totalorder %s36, 0
      %s39 = sadd.s32 %s38, 1
      %s40 = scalar_select %p37, %s38, %s39
      %p43 = pneg %p37
      %p44 = scmp.eq.s32.totalorder %s14, 1
      %p45 = por %p43, %p44
      %p46 = scmp.ne.s32.totalorder %s38, %s41
      %p47 = scmp.eq.s32.totalorder %s14, 0
      %p48 = por %p46, %p47
      %p49 = scmp.ne.s32.totalorder %s38, %s41
      %p50 = scmp.eq.s32.totalorder %s19, 1
      %p51 = por %p49, %p50
      %p52 = scmp.ne.s32.totalorder %s41, %s42
      %p53 = scmp.eq.s32.totalorder %s19, 0
      %p54 = por %p52, %p53
      %p55 = scmp.ne.s32.totalorder %s41, %s42
      %p56 = scmp.eq.s32.totalorder %s20, 1
      %p57 = por %p55, %p56
      %p59 = scmp.ne.s32.totalorder %s42, %s58
      %p60 = scmp.eq.s32.totalorder %s20, 0
      %p61 = por %p59, %p60
      %s63 = sadd.s32 %s62, 1
      %p66 = scmp.eq.s32.totalorder %s14, 1
      %p67 = scmp.ne.s32.totalorder %s62, %s64
      %p68 = scmp.eq.s32.totalorder %s14, 0
      %p69 = por %p67, %p68
      %p70 = scmp.ne.s32.totalorder %s62, %s64
      %p71 = scmp.eq.s32.totalorder %s19, 1
      %p72 = por %p70, %p71
      %p73 = scmp.ne.s32.totalorder %s64, %s65
      %p74 = scmp.eq.s32.totalorder %s19, 0
      %p75 = por %p73, %p74
      %p76 = scmp.ne.s32.totalorder %s64, %s65
      %p77 = scmp.eq.s32.totalorder %s20, 1
      %p78 = por %p76, %p77
      %p80 = scmp.ne.s32.totalorder %s65, %s79
      %p81 = scmp.eq.s32.totalorder %s20, 0
      %p82 = por %p80, %p81
      %s84 = sadd.s32 %s83, 1
      %p87 = scmp.eq.s32.totalorder %s14, 1
      %p88 = scmp.ne.s32.totalorder %s83, %s85
      %p89 = scmp.eq.s32.totalorder %s14, 0
      %p90 = por %p88, %p89
      %p91 = scmp.ne.s32.totalorder %s83, %s85
      %p92 = scmp.eq.s32.totalorder %s19, 1
      %p93 = por %p91, %p92
      %p94 = scmp.ne.s32.totalorder %s85, %s86
      %p95 = scmp.eq.s32.totalorder %s19, 0
      %p96 = por %p94, %p95
      %p97 = scmp.ne.s32.totalorder %s85, %s86
      %p98 = scmp.eq.s32.totalorder %s20, 1
      %p99 = por %p97, %p98
      %p101 = scmp.ne.s32.totalorder %s86, %s100
      %p102 = scmp.eq.s32.totalorder %s20, 0
      %p103 = por %p101, %p102
      %s105 = sadd.s32 %s104, 1
      %p108 = scmp.eq.s32.totalorder %s14, 1
      %p109 = scmp.ne.s32.totalorder %s104, %s106
      %p110 = scmp.eq.s32.totalorder %s14, 0
      %p111 = por %p109, %p110
      %p112 = scmp.ne.s32.totalorder %s104, %s106
      %p113 = scmp.eq.s32.totalorder %s19, 1
      %p114 = por %p112, %p113
      %p115 = scmp.ne.s32.totalorder %s106, %s107
      %p116 = scmp.eq.s32.totalorder %s19, 0
      %p117 = por %p115, %p116
      %p118 = scmp.ne.s32.totalorder %s106, %s107
      %p119 = scmp.eq.s32.totalorder %s20, 1
      %p120 = por %p118, %p119
      %p122 = scmp.ne.s32.totalorder %s107, %s121
      %p123 = scmp.eq.s32.totalorder %s20, 0
      %p124 = por %p122, %p123
      %s126 = sadd.s32 %s125, 1
      %p129 = scmp.eq.s32.totalorder %s14, 1
      %p130 = scmp.ne.s32.totalorder %s125, %s127
      %p131 = scmp.eq.s32.totalorder %s14, 0
      %p132 = por %p130, %p131
      %p133 = scmp.ne.s32.totalorder %s125, %s127
      %p134 = scmp.eq.s32.totalorder %s19, 1
      %p135 = por %p133, %p134
      %p136 = scmp.ne.s32.totalorder %s127, %s128
      %p137 = scmp.eq.s32.totalorder %s19, 0
      %p138 = por %p136, %p137
      %p139 = scmp.ne.s32.totalorder %s127, %s128
      %p140 = scmp.eq.s32.totalorder %s20, 1
      %p141 = por %p139, %p140
      %p143 = scmp.ne.s32.totalorder %s128, %s142
      %p144 = scmp.eq.s32.totalorder %s20, 0
      %p145 = por %p143, %p144
      %s146 = ssub.s32 %s21, %s33
      %s147 = ssub.s32 %s22, %s29
      %s148 = sor.u32 %s146, %s147
      %p149 = scmp.eq.s32.totalorder %s148, 0
      %s151 = sadd.s32 %s150, 1
      %s152 = scalar_select %p149, %s150, %s151
      %p155 = pneg %p149
      %p156 = scmp.eq.s32.totalorder %s14, 1
      %p157 = por %p155, %p156
      %p158 = scmp.ne.s32.totalorder %s150, %s153
      %p159 = scmp.eq.s32.totalorder %s14, 0
      %p160 = por %p158, %p159
      %p161 = scmp.ne.s32.totalorder %s150, %s153
      %p162 = scmp.eq.s32.totalorder %s19, 1
      %p163 = por %p161, %p162
      %p164 = scmp.ne.s32.totalorder %s153, %s154
      %p165 = scmp.eq.s32.totalorder %s19, 0
      %p166 = por %p164, %p165
      %p167 = scmp.ne.s32.totalorder %s153, %s154
      %p168 = scmp.eq.s32.totalorder %s20, 1
      %p169 = por %p167, %p168
      %p171 = scmp.ne.s32.totalorder %s154, %s170
      %p172 = scmp.eq.s32.totalorder %s20, 0
      %p173 = por %p171, %p172
      %p174 = scmp.le.s32.totalorder 1, %s14
      %p175 = scmp.lt.s32.totalorder %s14, 3
      %p176 = pnand %p174, %p175
      %p177 = pneg %p176
      // Predicated region
      $region9: #{tpu_custom_call.1} parent=5 // pred_check
        _
      $region10: #{tpu_custom_call.1} parent=5 // pred_check_branch
        %179 = sbr.rel (%p176) target = $region12
      $region11: #{tpu_custom_call.1} parent=5 // pred_region
        %s180 = ssub.s32 %s14, 1
        // Predicated region
        $region13: #{tpu_custom_call.1} parent=11 // pred_check
          %p181 = pneg %p75
        $region14: #{tpu_custom_call.1} parent=11 // pred_check_branch
          %183 = sbr.rel (%p181) target = $region16
        $region15: #{tpu_custom_call.1} parent=11 // pred_region
          _
        $region16: #{tpu_custom_call.1} parent=11 // pred_fallthru
          _
        // Predicated region
        $region17: #{tpu_custom_call.1} parent=11 // pred_check
          %p184 = pneg %p96
        $region18: #{tpu_custom_call.1} parent=11 // pred_check_branch
          %186 = sbr.rel (%p184) target = $region20
        $region19: #{tpu_custom_call.1} parent=11 // pred_region
          _
        $region20: #{tpu_custom_call.1} parent=11 // pred_fallthru
          _
        // Predicated region
        $region21: #{tpu_custom_call.1} parent=11 // pred_check
          %p187 = pneg %p117
        $region22: #{tpu_custom_call.1} parent=11 // pred_check_branch
          %189 = sbr.rel (%p187) target = $region24
        $region23: #{tpu_custom_call.1} parent=11 // pred_region
          _
        $region24: #{tpu_custom_call.1} parent=11 // pred_fallthru
          _
        // Predicated region
        $region25: #{tpu_custom_call.1} parent=11 // pred_check
          %p190 = pneg %p138
        $region26: #{tpu_custom_call.1} parent=11 // pred_check_branch
          %192 = sbr.rel (%p190) target = $region28
        $region27: #{tpu_custom_call.1} parent=11 // pred_region
          _
        $region28: #{tpu_custom_call.1} parent=11 // pred_fallthru
          _
      $region12: #{tpu_custom_call.1} parent=5 // pred_fallthru
        _
      %p193 = scmp.lt.s32.totalorder %s14, 2
      // Predicated region
      $region29: #{tpu_custom_call.1} parent=5 // pred_check
        %p194 = pneg %p193
      $region30: #{tpu_custom_call.1} parent=5 // pred_check_branch
        %196 = sbr.rel (%p194) target = $region32
      $region31: #{tpu_custom_call.1} parent=5 // pred_region
        // Predicated region
        $region33: #{tpu_custom_call.1} parent=31 // pred_check
          %p197 = pneg %p48
        $region34: #{tpu_custom_call.1} parent=31 // pred_check_branch
          %199 = sbr.rel (%p197) target = $region36
        $region35: #{tpu_custom_call.1} parent=31 // pred_region
          %s200 = smul.u32 2, %s22
          %p201 = scmp.lt.s32.totalorder %s21, 1
          %s202 = scalar_select %p201, %s21, 1
          %p203 = scmp.lt.s32.totalorder %s200, 1
          %s204 = scalar_select %p203, %s200, 1
          %s205 = smul.addr %s202, 2
          %s206 = sadd.s32 %s204, %s205
          %s207 = smul.addr %s206, 8
          %s208 = scalar_lea.vmem %s0, %s207
          %s209 = smul.u32 2, %s22
        $region36: #{tpu_custom_call.1} parent=31 // pred_fallthru
          _
      $region32: #{tpu_custom_call.1} parent=5 // pred_fallthru
        _
      %p210 = scmp.le.s32.totalorder 1, %s14
      %p211 = scmp.lt.s32.totalorder %s14, 3
      %p212 = pnand %p210, %p211
      %p213 = pneg %p212
      // Predicated region
      $region37: #{tpu_custom_call.1} parent=5 // pred_check
        _
      $region38: #{tpu_custom_call.1} parent=5 // pred_check_branch
        %215 = sbr.rel (%p212) target = $region40
      $region39: #{tpu_custom_call.1} parent=5 // pred_region
        %s216 = ssub.s32 %s14, 1
        %s217 = smul.u32 2, %s24
        %p218 = scmp.lt.s32.totalorder %s23, 1
        %s219 = scalar_select %p218, %s23, 1
        %p220 = scmp.lt.s32.totalorder %s217, 1
        %s221 = scalar_select %p220, %s217, 1
        %s222 = smul.addr %s219, 2
        %s223 = sadd.s32 %s221, %s222
        %s224 = smul.addr %s223, 8
        %s225 = scalar_lea.vmem %s0, %s224
        %p226 = pneg %p54
        %p227 = pneg %p51
        %p228 = pneg %p75
        %p229 = pneg %p72
        %p230 = pneg %p96
        %p231 = pneg %p93
        %p232 = pneg %p117
        %p233 = pneg %p114
        %p234 = pneg %p138
        %p235 = pneg %p135
        %p236 = pneg %p166
        %p237 = pneg %p163
        %s238 = sand.u32 %s153, 1
        %s239 = scalar_lea.sflag [#allocation3], %s238
        %s240 = sand.u32 %s153, 1
        %s241 = smul.addr %s240, 128
        %s242 = scalar_lea.vmem [#allocation2], %s241
        %s243 = smul.u32 2, %s24
        %p244 = scmp.lt.s32.totalorder %s23, 1
        %s245 = scalar_select %p244, %s23, 1
        %p246 = scmp.lt.s32.totalorder %s243, 1
        %s247 = scalar_select %p246, %s243, 1
        %s248 = smul.addr %s245, 2
        %s249 = sadd.s32 %s247, %s248
        %s250 = smul.addr %s249, 8
        %s251 = scalar_lea.vmem %s0, %s250
        %s252 = smul.u32 2, %s24
        %s253 = smul.u32 2, %s24
        %v254 = vld [vmem:[%s251] sm:$0xff]
        %v255 = vld [vmem:[%s251 + $0x8] sm:$0xff]
        %v256 = vld [vmem:[%s1] sm:$0xff]
        %v257 = vld [vmem:[%s1 + $0x8] sm:$0xff]
        %v258 = vld [vmem:[%s1 + $0x10] sm:$0xff]
        %v259 = vld [vmem:[%s1 + $0x18] sm:$0xff]
        %v260 = vld [vmem:[%s2] sm:$0xff]
        %v261 = vld [vmem:[%s2 + $0x8] sm:$0xff]
        %v262 = vld [vmem:[%s2 + $0x10] sm:$0xff]
        %v263 = vld [vmem:[%s2 + $0x18] sm:$0xff]
        %265 = vset.pattern.permute.xlu0 0
        %266 = vperm.xlu0 %265, %v260
        %v267 = vpop.permute.xlu0 %266
        %270 = vset.pattern.permute.xlu0 0
        %271 = vperm.xlu0 %270, %v261
        %v272 = vpop.permute.xlu0 %271
        %275 = vset.pattern.permute.xlu0 0
        %276 = vperm.xlu0 %275, %v262
        %v277 = vpop.permute.xlu0 %276
        %280 = vset.pattern.permute.xlu0 0
        %281 = vperm.xlu0 %280, %v263
        %v282 = vpop.permute.xlu0 %281
        %vm284 = vcmask 64512
        %v286 = vsel %vm284, %v256, 0
        %v289 = vsel %vm284, %v257, 0
        %v292 = vsel %vm284, %v258, 0
        %v295 = vsel %vm284, %v259, 0
        %297 = vmatpush.msra.mxu0 0.0
        %298 = vmatpush.msra.mxu0 0.0
        %299 = vmatpush.msra.mxu0 0.0
        %300 = vmatpush.msra.mxu0 0.0
        %301 = vmatpush.msra.mxu0 0.0
        %302 = vmatpush.msra.mxu0 0.0
        %303 = vmatpush.msra.mxu0 0.0
        %304 = vmatpush.msra.mxu0 0.0
        %305 = vmatpush.msra.mxu0 0.0
        %306 = vmatpush.msra.mxu0 0.0
        %307 = vmatpush.msra.mxu0 0.0
        %308 = vmatpush.msra.mxu0 0.0
        %309 = vmatpush.msra.mxu0 0.0
        %310 = vmatpush.msra.mxu0 0.0
        %311 = vmatpush.msra.mxu0 0.0
        %312 = vmatpush.msra.mxu0 %v254
        %313 = vmatmul.f32.gmra.mxu0 %v286
        %v314 = vpop.f32.mrf.mxu0
        %v315 = vadd.f32 %v267, %v314
        %316 = vmatmul.f32.gmra.mxu0 %v289
        %v317 = vpop.f32.mrf.mxu0
        %v318 = vadd.f32 %v272, %v317
        %319 = vmatmul.f32.gmra.mxu0 %v292
        %v320 = vpop.f32.mrf.mxu0
        %v321 = vadd.f32 %v277, %v320
        %322 = vmatmul.f32.gmra.mxu0 %v295
        %v323 = vpop.f32.mrf.mxu0
        %v324 = vadd.f32 %v282, %v323
        %325 = vdwg.mxu0
        %326 = vmatpush.msra.mxu0 0.0
        %327 = vmatpush.msra.mxu0 0.0
        %328 = vmatpush.msra.mxu0 0.0
        %329 = vmatpush.msra.mxu0 0.0
        %330 = vmatpush.msra.mxu0 0.0
        %331 = vmatpush.msra.mxu0 0.0
        %332 = vmatpush.msra.mxu0 0.0
        %333 = vmatpush.msra.mxu0 0.0
        %334 = vmatpush.msra.mxu0 0.0
        %335 = vmatpush.msra.mxu0 0.0
        %336 = vmatpush.msra.mxu0 0.0
        %337 = vmatpush.msra.mxu0 0.0
        %338 = vmatpush.msra.mxu0 0.0
        %339 = vmatpush.msra.mxu0 0.0
        %340 = vmatpush.msra.mxu0 0.0
        %341 = vmatpush.msra.mxu0 %v255
        %342 = vmatmul.f32.gmra.mxu0 %v286
        %v343 = vpop.f32.mrf.mxu0
        %v344 = vadd.f32 %v267, %v343
        %345 = vmatmul.f32.gmra.mxu0 %v289
        %v346 = vpop.f32.mrf.mxu0
        %v347 = vadd.f32 %v272, %v346
        %348 = vmatmul.f32.gmra.mxu0 %v292
        %v349 = vpop.f32.mrf.mxu0
        %v350 = vadd.f32 %v277, %v349
        %351 = vmatmul.f32.gmra.mxu0 %v295
        %v352 = vpop.f32.mrf.mxu0
        %v353 = vadd.f32 %v282, %v352
        %354 = vdwg.mxu0
        %v355 = vmax.f32 %v315, 0.0
        %v356 = vmax.f32 %v344, 0.0
        %v357 = vmax.f32 %v318, 0.0
        %v358 = vmax.f32 %v347, 0.0
        %v359 = vmax.f32 %v321, 0.0
        %v360 = vmax.f32 %v350, 0.0
        %v361 = vmax.f32 %v324, 0.0
        %v362 = vmax.f32 %v353, 0.0
        %v363 = vld [vmem:[%s3] sm:$0xff]
        %v364 = vld [vmem:[%s3 + $0x8] sm:$0xff]
        %v365 = vld [vmem:[%s3 + $0x10] sm:$0xff]
        %v366 = vld [vmem:[%s3 + $0x18] sm:$0xff]
        %v367 = vld [vmem:[%s3 + $0x20] sm:$0xff]
        %v368 = vld [vmem:[%s3 + $0x28] sm:$0xff]
        %v369 = vld [vmem:[%s3 + $0x30] sm:$0xff]
        %v370 = vld [vmem:[%s3 + $0x38] sm:$0xff]
        %v371 = vld [vmem:[%s4] sm:$0xff]
        %v372 = vld [vmem:[%s4 + $0x8] sm:$0xff]
        %v373 = vld [vmem:[%s4 + $0x10] sm:$0xff]
        %v374 = vld [vmem:[%s4 + $0x18] sm:$0xff]
        %v375 = vld [vmem:[%s4 + $0x20] sm:$0xff]
        %v376 = vld [vmem:[%s4 + $0x28] sm:$0xff]
        %v377 = vld [vmem:[%s4 + $0x30] sm:$0xff]
        %v378 = vld [vmem:[%s4 + $0x38] sm:$0xff]
        %380 = vset.pattern.permute.xlu0 0
        %381 = vperm.xlu0 %380, %v371
        %v382 = vpop.permute.xlu0 %381
        %385 = vset.pattern.permute.xlu0 0
        %386 = vperm.xlu0 %385, %v372
        %v387 = vpop.permute.xlu0 %386
        %390 = vset.pattern.permute.xlu0 0
        %391 = vperm.xlu0 %390, %v373
        %v392 = vpop.permute.xlu0 %391
        %395 = vset.pattern.permute.xlu0 0
        %396 = vperm.xlu0 %395, %v374
        %v397 = vpop.permute.xlu0 %396
        %400 = vset.pattern.permute.xlu0 0
        %401 = vperm.xlu0 %400, %v375
        %v402 = vpop.permute.xlu0 %401
        %405 = vset.pattern.permute.xlu0 0
        %406 = vperm.xlu0 %405, %v376
        %v407 = vpop.permute.xlu0 %406
        %410 = vset.pattern.permute.xlu0 0
        %411 = vperm.xlu0 %410, %v377
        %v412 = vpop.permute.xlu0 %411
        %415 = vset.pattern.permute.xlu0 0
        %416 = vperm.xlu0 %415, %v378
        %v417 = vpop.permute.xlu0 %416
        %vm419 = vcmask 261120
        %v421 = vsel %vm419, %v363, 0
        %v424 = vsel %vm419, %v364, 0
        %v427 = vsel %vm419, %v365, 0
        %v430 = vsel %vm419, %v366, 0
        %v433 = vsel %vm419, %v367, 0
        %v436 = vsel %vm419, %v368, 0
        %v439 = vsel %vm419, %v369, 0
        %v442 = vsel %vm419, %v370, 0
        %444 = vmatpush.msra.mxu0 0.0
        %445 = vmatpush.msra.mxu0 0.0
        %446 = vmatpush.msra.mxu0 0.0
        %447 = vmatpush.msra.mxu0 0.0
        %448 = vmatpush.msra.mxu0 0.0
        %449 = vmatpush.msra.mxu0 0.0
        %450 = vmatpush.msra.mxu0 0.0
        %451 = vmatpush.msra.mxu0 0.0
        %452 = vmatpush.msra.mxu0 0.0
        %453 = vmatpush.msra.mxu0 0.0
        %454 = vmatpush.msra.mxu0 0.0
        %455 = vmatpush.msra.mxu0 0.0
        %456 = vmatpush.msra.mxu0 %v361
        %457 = vmatpush.msra.mxu0 %v359
        %458 = vmatpush.msra.mxu0 %v357
        %459 = vmatpush.msra.mxu0 %v355
        %460 = vmatmul.f32.gmra.mxu0 %v421
        %v461 = vpop.f32.mrf.mxu0
        %v462 = vadd.f32 %v382, %v461
        %463 = vmatmul.f32.gmra.mxu0 %v424
        %v464 = vpop.f32.mrf.mxu0
        %v465 = vadd.f32 %v387, %v464
        %466 = vmatmul.f32.gmra.mxu0 %v427
        %v467 = vpop.f32.mrf.mxu0
        %v468 = vadd.f32 %v392, %v467
        %469 = vmatmul.f32.gmra.mxu0 %v430
        %v470 = vpop.f32.mrf.mxu0
        %v471 = vadd.f32 %v397, %v470
        %472 = vmatmul.f32.gmra.mxu0 %v433
        %v473 = vpop.f32.mrf.mxu0
        %v474 = vadd.f32 %v402, %v473
        %475 = vmatmul.f32.gmra.mxu0 %v436
        %v476 = vpop.f32.mrf.mxu0
        %v477 = vadd.f32 %v407, %v476
        %478 = vmatmul.f32.gmra.mxu0 %v439
        %v479 = vpop.f32.mrf.mxu0
        %v480 = vadd.f32 %v412, %v479
        %481 = vmatmul.f32.gmra.mxu0 %v442
        %v482 = vpop.f32.mrf.mxu0
        %v483 = vadd.f32 %v417, %v482
        %484 = vdwg.mxu0
        %485 = vmatpush.msra.mxu0 0.0
        %486 = vmatpush.msra.mxu0 0.0
        %487 = vmatpush.msra.mxu0 0.0
        %488 = vmatpush.msra.mxu0 0.0
        %489 = vmatpush.msra.mxu0 0.0
        %490 = vmatpush.msra.mxu0 0.0
        %491 = vmatpush.msra.mxu0 0.0
        %492 = vmatpush.msra.mxu0 0.0
        %493 = vmatpush.msra.mxu0 0.0
        %494 = vmatpush.msra.mxu0 0.0
        %495 = vmatpush.msra.mxu0 0.0
        %496 = vmatpush.msra.mxu0 0.0
        %497 = vmatpush.msra.mxu0 %v362
        %498 = vmatpush.msra.mxu0 %v360
        %499 = vmatpush.msra.mxu0 %v358
        %500 = vmatpush.msra.mxu0 %v356
        %501 = vmatmul.f32.gmra.mxu0 %v421
        %v502 = vpop.f32.mrf.mxu0
        %v503 = vadd.f32 %v382, %v502
        %504 = vmatmul.f32.gmra.mxu0 %v424
        %v505 = vpop.f32.mrf.mxu0
        %v506 = vadd.f32 %v387, %v505
        %507 = vmatmul.f32.gmra.mxu0 %v427
        %v508 = vpop.f32.mrf.mxu0
        %v509 = vadd.f32 %v392, %v508
        %510 = vmatmul.f32.gmra.mxu0 %v430
        %v511 = vpop.f32.mrf.mxu0
        %v512 = vadd.f32 %v397, %v511
        %513 = vmatmul.f32.gmra.mxu0 %v433
        %v514 = vpop.f32.mrf.mxu0
        %v515 = vadd.f32 %v402, %v514
        %516 = vmatmul.f32.gmra.mxu0 %v436
        %v517 = vpop.f32.mrf.mxu0
        %v518 = vadd.f32 %v407, %v517
        %519 = vmatmul.f32.gmra.mxu0 %v439
        %v520 = vpop.f32.mrf.mxu0
        %v521 = vadd.f32 %v412, %v520
        %522 = vmatmul.f32.gmra.mxu0 %v442
        %v523 = vpop.f32.mrf.mxu0
        %v524 = vadd.f32 %v417, %v523
        %525 = vdwg.mxu0
        %v526 = vmax.f32 %v462, 0.0
        %v527 = vmax.f32 %v503, 0.0
        %v528 = vmax.f32 %v465, 0.0
        %v529 = vmax.f32 %v506, 0.0
        %v530 = vmax.f32 %v468, 0.0
        %v531 = vmax.f32 %v509, 0.0
        %v532 = vmax.f32 %v471, 0.0
        %v533 = vmax.f32 %v512, 0.0
        %v534 = vmax.f32 %v474, 0.0
        %v535 = vmax.f32 %v515, 0.0
        %v536 = vmax.f32 %v477, 0.0
        %v537 = vmax.f32 %v518, 0.0
        %v538 = vmax.f32 %v480, 0.0
        %v539 = vmax.f32 %v521, 0.0
        %v540 = vmax.f32 %v483, 0.0
        %v541 = vmax.f32 %v524, 0.0
        %542 = vst [vmem:[%s242] sm:$0xff] %v526
        %543 = vst [vmem:[%s242 + $0x8] sm:$0xff] %v527
        %544 = vst [vmem:[%s242 + $0x10] sm:$0xff] %v528
        %545 = vst [vmem:[%s242 + $0x18] sm:$0xff] %v529
        %546 = vst [vmem:[%s242 + $0x20] sm:$0xff] %v530
        %547 = vst [vmem:[%s242 + $0x28] sm:$0xff] %v531
        %548 = vst [vmem:[%s242 + $0x30] sm:$0xff] %v532
        %549 = vst [vmem:[%s242 + $0x38] sm:$0xff] %v533
        %550 = vst [vmem:[%s242 + $0x40] sm:$0xff] %v534
        %551 = vst [vmem:[%s242 + $0x48] sm:$0xff] %v535
        %552 = vst [vmem:[%s242 + $0x50] sm:$0xff] %v536
        %553 = vst [vmem:[%s242 + $0x58] sm:$0xff] %v537
        %554 = vst [vmem:[%s242 + $0x60] sm:$0xff] %v538
        %555 = vst [vmem:[%s242 + $0x68] sm:$0xff] %v539
        %556 = vst [vmem:[%s242 + $0x70] sm:$0xff] %v540
        %557 = vst [vmem:[%s242 + $0x78] sm:$0xff] %v541
        %s558 = sand.u32 %s153, 1
        %s559 = scalar_lea.sflag [#allocation3], %s558
        %s560 = sand.u32 %s153, 1
        %s561 = smul.addr %s560, 128
        %s562 = scalar_lea.vmem [#allocation2], %s561
        // Predicated region
        $region41: #{tpu_custom_call.1} parent=39 // pred_check
          %p563 = pneg %p163
        $region42: #{tpu_custom_call.1} parent=39 // pred_check_branch
          %565 = sbr.rel (%p563) target = $region44
        $region43: #{tpu_custom_call.1} parent=39 // pred_region
          %s566 = smul.u32 2, %s24
          %568 = vsyncadd %s559, 0
          %s569 = smul.addr %s23, 16
          %s570 = sadd.s32 %s566, %s569
          %s571 = smul.addr %s570, 8
          %s572 = scalar_lea.hbm %s5, %s571
          %s573 = sshll.u32 %s562, 4
          %s574 = int_to_ptr.vmem [resolvable:$true] %s573
          %s575 = sshll.u32 %s572, 4
          %s576 = int_to_ptr.hbm [resolvable:$true] %s575
          %581 = dma.vmem_to_hbm [thread:$0]  %s574, 2048, %s576, %s559, 256, 256, 16
        $region44: #{tpu_custom_call.1} parent=39 // pred_fallthru
          _
      $region40: #{tpu_custom_call.1} parent=5 // pred_fallthru
        _
      %p582 = scmp.le.s32.totalorder 2, %s14
      // Predicated region
      $region45: #{tpu_custom_call.1} parent=5 // pred_check
        %p583 = pneg %p582
      $region46: #{tpu_custom_call.1} parent=5 // pred_check_branch
        %585 = sbr.rel (%p583) target = $region48
      $region47: #{tpu_custom_call.1} parent=5 // pred_region
        %s586 = ssub.s32 %s14, 2
        // Predicated region
        $region49: #{tpu_custom_call.1} parent=47 // pred_check
          %p587 = pneg %p169
        $region50: #{tpu_custom_call.1} parent=47 // pred_check_branch
          %589 = sbr.rel (%p587) target = $region52
        $region51: #{tpu_custom_call.1} parent=47 // pred_region
          %s590 = sand.u32 %s154, 1
          %s591 = scalar_lea.sflag [#allocation3], %s590
          %s592 = sand.u32 %s154, 1
          %s593 = smul.addr %s592, 128
          %s594 = scalar_lea.vmem [#allocation2], %s593
          %596 = dma.done %s591, 2048
        $region52: #{tpu_custom_call.1} parent=47 // pred_fallthru
          _
      $region48: #{tpu_custom_call.1} parent=5 // pred_fallthru
        _
    $region6: #{tpu_custom_call.1} parent=1 // loop_footer
      %s18 = sadd.s32 1, %s14
    $region7: #{tpu_custom_call.1} parent=1 // loop_footer_branch
      %13 = sbr.rel target = $region3
    $region8: #{tpu_custom_call.1} parent=1 // loop_exit
      _
    %597 = vsyncpa [#allocation3], 1
    %s598 = scalar_lea.sflag [#allocation3], 1
    %599 = vsyncpa %s598, 1

// kernel: tpu_custom_call.1
$region0: #{tpu_custom_call.1}
  #allocation0 [shape = 'u32[]', space=smem, size = 0x4, offset = 0x4, fixed_abs, tag = 'smem constant byte address 0x4 - core index']
  #allocation1 [shape = 'u32[72,128]{1,0:T(1,128)}', space=vmem, size = 0x9000, scoped, tag = 'internal scratch']
  %s0 = inlined_call_operand.vmem [shape: f32[2,8,256], index: 0, kind: input, shape index: {}]
  %s1 = inlined_call_operand.vmem [shape: f32[32,8], index: 1, kind: input, shape index: {}]
  %s2 = inlined_call_operand.vmem [shape: f32[32,1], index: 2, kind: input, shape index: {}]
  %s3 = inlined_call_operand.vmem [shape: f32[64,32], index: 3, kind: input, shape index: {}]
  %s4 = inlined_call_operand.vmem [shape: f32[64,1], index: 4, kind: input, shape index: {}]
  %s5 = inlined_call_operand.hbm [shape: f32[2,64,256], index: 5, kind: output, shape index: {}]
  %s6 = sld [smem:[#allocation0]]
  $region53: #{tpu_custom_call.1} parent=0
    _
  %s8 = ssub.s32 1, %s6
  %s9 = scalar_select 0, %s8, %s6
  $region1: #{tpu_custom_call.1} parent=0
    #allocation2 [shape = 'u8[131072]{0}', space=vmem, size = 0x20000, scoped, tag = 'output window, operand 0']
    #allocation3 [shape = 's32[2]{0}', space=sflag, size = 0x8, scoped, tag = 'scoped memory for tpu_custom_call.1']
    %10 = vsyncpa [#allocation3], 0
    %s11 = scalar_lea.sflag [#allocation3], 1
    %12 = vsyncpa %s11, 0
    loop: start=0, step=1, limit=4
    $region2: #{tpu_custom_call.1} parent=1 // loop_pre_header
      _
    $region3: #{tpu_custom_call.1} parent=1 // loop_header
      %s14 = sphi 0, %s18
      %p15 = scmp.ge.s32.totalorder %s14, 4
      %s21 = sphi 0, %s33
      %s22 = sphi 0, %s29
      %s23 = sphi 0, %s21
      %s24 = sphi 0, %s22
      %s25 = sphi 0, %s23
      %s26 = sphi 0, %s24
      %s38 = sphi 0, %s40
      %s41 = sphi 0, %s38
      %s42 = sphi 0, %s41
      %s58 = sphi 0, %s42
      %s62 = sphi 0, %s62
      %s64 = sphi 0, %s62
      %s65 = sphi 0, %s64
      %s79 = sphi 0, %s65
      %s83 = sphi 0, %s83
      %s85 = sphi 0, %s83
      %s86 = sphi 0, %s85
      %s100 = sphi 0, %s86
      %s104 = sphi 0, %s104
      %s106 = sphi 0, %s104
      %s107 = sphi 0, %s106
      %s121 = sphi 0, %s107
      %s125 = sphi 0, %s125
      %s127 = sphi 0, %s125
      %s128 = sphi 0, %s127
      %s142 = sphi 0, %s128
      %s150 = sphi 0, %s152
      %s153 = sphi 0, %s150
      %s154 = sphi 0, %s153
      %s170 = sphi 0, %s154
    $region4: #{tpu_custom_call.1} parent=1 // loop_header_branch
      %17 = sbr.rel (%p15) target = $region8
    $region5: #{tpu_custom_call.1} parent=1 // loop_body
      %s19 = ssub.s32 %s14, 1
      %s20 = ssub.s32 %s14, 2
      %s27 = sadd.s32 1, %s22
      %p28 = scmp.ge.s32.totalorder %s27, 1
      %s29 = scalar_select %p28, 0, %s27
      %s30 = sadd.s32 1, %s21
      %s31 = scalar_select %p28, %s30, %s21
      %p32 = scmp.ge.s32.totalorder %s31, 2
      %s33 = scalar_select %p32, 0, %s31
      %s34 = ssub.s32 %s21, %s33
      %s35 = ssub.s32 %s22, %s29
      %s36 = sor.u32 %s34, %s35
      %p37 = scmp.eq.s32.totalorder %s36, 0
      %s39 = sadd.s32 %s38, 1
      %s40 = scalar_select %p37, %s38, %s39
      %p43 = pneg %p37
      %p44 = scmp.eq.s32.totalorder %s14, 1
      %p45 = por %p43, %p44
      %p46 = scmp.ne.s32.totalorder %s38, %s41
      %p47 = scmp.eq.s32.totalorder %s14, 0
      %p48 = por %p46, %p47
      %p49 = scmp.ne.s32.totalorder %s38, %s41
      %p50 = scmp.eq.s32.totalorder %s19, 1
      %p51 = por %p49, %p50
      %p52 = scmp.ne.s32.totalorder %s41, %s42
      %p53 = scmp.eq.s32.totalorder %s19, 0
      %p54 = por %p52, %p53
      %p55 = scmp.ne.s32.totalorder %s41, %s42
      %p56 = scmp.eq.s32.totalorder %s20, 1
      %p57 = por %p55, %p56
      %p59 = scmp.ne.s32.totalorder %s42, %s58
      %p60 = scmp.eq.s32.totalorder %s20, 0
      %p61 = por %p59, %p60
      %s63 = sadd.s32 %s62, 1
      %p66 = scmp.eq.s32.totalorder %s14, 1
      %p67 = scmp.ne.s32.totalorder %s62, %s64
      %p68 = scmp.eq.s32.totalorder %s14, 0
      %p69 = por %p67, %p68
      %p70 = scmp.ne.s32.totalorder %s62, %s64
      %p71 = scmp.eq.s32.totalorder %s19, 1
      %p72 = por %p70, %p71
      %p73 = scmp.ne.s32.totalorder %s64, %s65
      %p74 = scmp.eq.s32.totalorder %s19, 0
      %p75 = por %p73, %p74
      %p76 = scmp.ne.s32.totalorder %s64, %s65
      %p77 = scmp.eq.s32.totalorder %s20, 1
      %p78 = por %p76, %p77
      %p80 = scmp.ne.s32.totalorder %s65, %s79
      %p81 = scmp.eq.s32.totalorder %s20, 0
      %p82 = por %p80, %p81
      %s84 = sadd.s32 %s83, 1
      %p87 = scmp.eq.s32.totalorder %s14, 1
      %p88 = scmp.ne.s32.totalorder %s83, %s85
      %p89 = scmp.eq.s32.totalorder %s14, 0
      %p90 = por %p88, %p89
      %p91 = scmp.ne.s32.totalorder %s83, %s85
      %p92 = scmp.eq.s32.totalorder %s19, 1
      %p93 = por %p91, %p92
      %p94 = scmp.ne.s32.totalorder %s85, %s86
      %p95 = scmp.eq.s32.totalorder %s19, 0
      %p96 = por %p94, %p95
      %p97 = scmp.ne.s32.totalorder %s85, %s86
      %p98 = scmp.eq.s32.totalorder %s20, 1
      %p99 = por %p97, %p98
      %p101 = scmp.ne.s32.totalorder %s86, %s100
      %p102 = scmp.eq.s32.totalorder %s20, 0
      %p103 = por %p101, %p102
      %s105 = sadd.s32 %s104, 1
      %p108 = scmp.eq.s32.totalorder %s14, 1
      %p109 = scmp.ne.s32.totalorder %s104, %s106
      %p110 = scmp.eq.s32.totalorder %s14, 0
      %p111 = por %p109, %p110
      %p112 = scmp.ne.s32.totalorder %s104, %s106
      %p113 = scmp.eq.s32.totalorder %s19, 1
      %p114 = por %p112, %p113
      %p115 = scmp.ne.s32.totalorder %s106, %s107
      %p116 = scmp.eq.s32.totalorder %s19, 0
      %p117 = por %p115, %p116
      %p118 = scmp.ne.s32.totalorder %s106, %s107
      %p119 = scmp.eq.s32.totalorder %s20, 1
      %p120 = por %p118, %p119
      %p122 = scmp.ne.s32.totalorder %s107, %s121
      %p123 = scmp.eq.s32.totalorder %s20, 0
      %p124 = por %p122, %p123
      %s126 = sadd.s32 %s125, 1
      %p129 = scmp.eq.s32.totalorder %s14, 1
      %p130 = scmp.ne.s32.totalorder %s125, %s127
      %p131 = scmp.eq.s32.totalorder %s14, 0
      %p132 = por %p130, %p131
      %p133 = scmp.ne.s32.totalorder %s125, %s127
      %p134 = scmp.eq.s32.totalorder %s19, 1
      %p135 = por %p133, %p134
      %p136 = scmp.ne.s32.totalorder %s127, %s128
      %p137 = scmp.eq.s32.totalorder %s19, 0
      %p138 = por %p136, %p137
      %p139 = scmp.ne.s32.totalorder %s127, %s128
      %p140 = scmp.eq.s32.totalorder %s20, 1
      %p141 = por %p139, %p140
      %p143 = scmp.ne.s32.totalorder %s128, %s142
      %p144 = scmp.eq.s32.totalorder %s20, 0
      %p145 = por %p143, %p144
      %s146 = ssub.s32 %s21, %s33
      %s147 = ssub.s32 %s22, %s29
      %s148 = sor.u32 %s146, %s147
      %p149 = scmp.eq.s32.totalorder %s148, 0
      %s151 = sadd.s32 %s150, 1
      %s152 = scalar_select %p149, %s150, %s151
      %p155 = pneg %p149
      %p156 = scmp.eq.s32.totalorder %s14, 1
      %p157 = por %p155, %p156
      %p158 = scmp.ne.s32.totalorder %s150, %s153
      %p159 = scmp.eq.s32.totalorder %s14, 0
      %p160 = por %p158, %p159
      %p161 = scmp.ne.s32.totalorder %s150, %s153
      %p162 = scmp.eq.s32.totalorder %s19, 1
      %p163 = por %p161, %p162
      %p164 = scmp.ne.s32.totalorder %s153, %s154
      %p165 = scmp.eq.s32.totalorder %s19, 0
      %p166 = por %p164, %p165
      %p167 = scmp.ne.s32.totalorder %s153, %s154
      %p168 = scmp.eq.s32.totalorder %s20, 1
      %p169 = por %p167, %p168
      %p171 = scmp.ne.s32.totalorder %s154, %s170
      %p172 = scmp.eq.s32.totalorder %s20, 0
      %p173 = por %p171, %p172
      %p174 = scmp.le.s32.totalorder 1, %s14
      %p175 = scmp.lt.s32.totalorder %s14, 3
      %p176 = pnand %p174, %p175
      %p177 = pneg %p176
      // Predicated region
      $region9: #{tpu_custom_call.1} parent=5 // pred_check
        _
      $region10: #{tpu_custom_call.1} parent=5 // pred_check_branch
        %179 = sbr.rel (%p176) target = $region12
      $region11: #{tpu_custom_call.1} parent=5 // pred_region
        %s180 = ssub.s32 %s14, 1
        // Predicated region
        $region13: #{tpu_custom_call.1} parent=11 // pred_check
          %p181 = pneg %p75
        $region14: #{tpu_custom_call.1} parent=11 // pred_check_branch
          %183 = sbr.rel (%p181) target = $region16
        $region15: #{tpu_custom_call.1} parent=11 // pred_region
          _
        $region16: #{tpu_custom_call.1} parent=11 // pred_fallthru
          _
        // Predicated region
        $region17: #{tpu_custom_call.1} parent=11 // pred_check
          %p184 = pneg %p96
        $region18: #{tpu_custom_call.1} parent=11 // pred_check_branch
          %186 = sbr.rel (%p184) target = $region20
        $region19: #{tpu_custom_call.1} parent=11 // pred_region
          _
        $region20: #{tpu_custom_call.1} parent=11 // pred_fallthru
          _
        // Predicated region
        $region21: #{tpu_custom_call.1} parent=11 // pred_check
          %p187 = pneg %p117
        $region22: #{tpu_custom_call.1} parent=11 // pred_check_branch
          %189 = sbr.rel (%p187) target = $region24
        $region23: #{tpu_custom_call.1} parent=11 // pred_region
          _
        $region24: #{tpu_custom_call.1} parent=11 // pred_fallthru
          _
        // Predicated region
        $region25: #{tpu_custom_call.1} parent=11 // pred_check
          %p190 = pneg %p138
        $region26: #{tpu_custom_call.1} parent=11 // pred_check_branch
          %192 = sbr.rel (%p190) target = $region28
        $region27: #{tpu_custom_call.1} parent=11 // pred_region
          _
        $region28: #{tpu_custom_call.1} parent=11 // pred_fallthru
          _
      $region12: #{tpu_custom_call.1} parent=5 // pred_fallthru
        _
      %p193 = scmp.lt.s32.totalorder %s14, 2
      // Predicated region
      $region29: #{tpu_custom_call.1} parent=5 // pred_check
        %p194 = pneg %p193
      $region30: #{tpu_custom_call.1} parent=5 // pred_check_branch
        %196 = sbr.rel (%p194) target = $region32
      $region31: #{tpu_custom_call.1} parent=5 // pred_region
        // Predicated region
        $region33: #{tpu_custom_call.1} parent=31 // pred_check
          %p197 = pneg %p48
        $region34: #{tpu_custom_call.1} parent=31 // pred_check_branch
          %199 = sbr.rel (%p197) target = $region36
        $region35: #{tpu_custom_call.1} parent=31 // pred_region
          %s200 = smul.u32 2, %s22
          %p201 = scmp.lt.s32.totalorder %s21, 1
          %s202 = scalar_select %p201, %s21, 1
          %p203 = scmp.lt.s32.totalorder %s200, 1
          %s204 = scalar_select %p203, %s200, 1
          %s205 = smul.addr %s202, 2
          %s206 = sadd.s32 %s204, %s205
          %s207 = smul.addr %s206, 8
          %s208 = scalar_lea.vmem %s0, %s207
          %s209 = smul.u32 2, %s22
        $region36: #{tpu_custom_call.1} parent=31 // pred_fallthru
          _
      $region32: #{tpu_custom_call.1} parent=5 // pred_fallthru
        _
      %p210 = scmp.le.s32.totalorder 1, %s14
      %p211 = scmp.lt.s32.totalorder %s14, 3
      %p212 = pnand %p210, %p211
      %p213 = pneg %p212
      // Predicated region
      $region37: #{tpu_custom_call.1} parent=5 // pred_check
        _
      $region38: #{tpu_custom_call.1} parent=5 // pred_check_branch
        %215 = sbr.rel (%p212) target = $region40
      $region39: #{tpu_custom_call.1} parent=5 // pred_region
        %s216 = ssub.s32 %s14, 1
        %s217 = smul.u32 2, %s24
        %p218 = scmp.lt.s32.totalorder %s23, 1
        %s219 = scalar_select %p218, %s23, 1
        %p220 = scmp.lt.s32.totalorder %s217, 1
        %s221 = scalar_select %p220, %s217, 1
        %s222 = smul.addr %s219, 2
        %s223 = sadd.s32 %s221, %s222
        %s224 = smul.addr %s223, 8
        %s225 = scalar_lea.vmem %s0, %s224
        %p226 = pneg %p54
        %p227 = pneg %p51
        %p228 = pneg %p75
        %p229 = pneg %p72
        %p230 = pneg %p96
        %p231 = pneg %p93
        %p232 = pneg %p117
        %p233 = pneg %p114
        %p234 = pneg %p138
        %p235 = pneg %p135
        %p236 = pneg %p166
        %p237 = pneg %p163
        %s238 = sand.u32 %s153, 1
        %s239 = scalar_lea.sflag [#allocation3], %s238
        %s240 = sand.u32 %s153, 1
        %s241 = smul.addr %s240, 128
        %s242 = scalar_lea.vmem [#allocation2], %s241
        %s243 = smul.u32 2, %s24
        %p244 = scmp.lt.s32.totalorder %s23, 1
        %s245 = scalar_select %p244, %s23, 1
        %p246 = scmp.lt.s32.totalorder %s243, 1
        %s247 = scalar_select %p246, %s243, 1
        %s248 = smul.addr %s245, 2
        %s249 = sadd.s32 %s247, %s248
        %s250 = smul.addr %s249, 8
        %s251 = scalar_lea.vmem %s0, %s250
        %s252 = smul.u32 2, %s24
        %s253 = smul.u32 2, %s24
        %v254 = vld [vmem:[%s251] sm:$0xff]
        %v255 = vld [vmem:[%s251 + $0x8] sm:$0xff]
        %v256 = vld [vmem:[%s1] sm:$0xff]
        %v257 = vld [vmem:[%s1 + $0x8] sm:$0xff]
        %v258 = vld [vmem:[%s1 + $0x10] sm:$0xff]
        %v259 = vld [vmem:[%s1 + $0x18] sm:$0xff]
        %v260 = vld [vmem:[%s2] sm:$0xff]
        %v261 = vld [vmem:[%s2 + $0x8] sm:$0xff]
        %v262 = vld [vmem:[%s2 + $0x10] sm:$0xff]
        %v263 = vld [vmem:[%s2 + $0x18] sm:$0xff]
        %265 = vset.pattern.permute.xlu0 0
        %266 = vperm.xlu0 %265, %v260
        %v267 = vpop.permute.xlu0 %266
        %270 = vset.pattern.permute.xlu0 0
        %271 = vperm.xlu0 %270, %v261
        %v272 = vpop.permute.xlu0 %271
        %275 = vset.pattern.permute.xlu0 0
        %276 = vperm.xlu0 %275, %v262
        %v277 = vpop.permute.xlu0 %276
        %280 = vset.pattern.permute.xlu0 0
        %281 = vperm.xlu0 %280, %v263
        %v282 = vpop.permute.xlu0 %281
        %vm284 = vcmask 64512
        %v286 = vsel %vm284, %v256, 0
        %v289 = vsel %vm284, %v257, 0
        %v292 = vsel %vm284, %v258, 0
        %v295 = vsel %vm284, %v259, 0
        %297 = vmatpush.msra.mxu0 0.0
        %298 = vmatpush.msra.mxu0 0.0
        %299 = vmatpush.msra.mxu0 0.0
        %300 = vmatpush.msra.mxu0 0.0
        %301 = vmatpush.msra.mxu0 0.0
        %302 = vmatpush.msra.mxu0 0.0
        %303 = vmatpush.msra.mxu0 0.0
        %304 = vmatpush.msra.mxu0 0.0
        %305 = vmatpush.msra.mxu0 0.0
        %306 = vmatpush.msra.mxu0 0.0
        %307 = vmatpush.msra.mxu0 0.0
        %308 = vmatpush.msra.mxu0 0.0
        %309 = vmatpush.msra.mxu0 0.0
        %310 = vmatpush.msra.mxu0 0.0
        %311 = vmatpush.msra.mxu0 0.0
        %312 = vmatpush.msra.mxu0 %v254
        %313 = vmatmul.f32.gmra.mxu0 %v286
        %v314 = vpop.f32.mrf.mxu0
        %v315 = vadd.f32 %v267, %v314
        %316 = vmatmul.f32.gmra.mxu0 %v289
        %v317 = vpop.f32.mrf.mxu0
        %v318 = vadd.f32 %v272, %v317
        %319 = vmatmul.f32.gmra.mxu0 %v292
        %v320 = vpop.f32.mrf.mxu0
        %v321 = vadd.f32 %v277, %v320
        %322 = vmatmul.f32.gmra.mxu0 %v295
        %v323 = vpop.f32.mrf.mxu0
        %v324 = vadd.f32 %v282, %v323
        %325 = vdwg.mxu0
        %326 = vmatpush.msra.mxu0 0.0
        %327 = vmatpush.msra.mxu0 0.0
        %328 = vmatpush.msra.mxu0 0.0
        %329 = vmatpush.msra.mxu0 0.0
        %330 = vmatpush.msra.mxu0 0.0
        %331 = vmatpush.msra.mxu0 0.0
        %332 = vmatpush.msra.mxu0 0.0
        %333 = vmatpush.msra.mxu0 0.0
        %334 = vmatpush.msra.mxu0 0.0
        %335 = vmatpush.msra.mxu0 0.0
        %336 = vmatpush.msra.mxu0 0.0
        %337 = vmatpush.msra.mxu0 0.0
        %338 = vmatpush.msra.mxu0 0.0
        %339 = vmatpush.msra.mxu0 0.0
        %340 = vmatpush.msra.mxu0 0.0
        %341 = vmatpush.msra.mxu0 %v255
        %342 = vmatmul.f32.gmra.mxu0 %v286
        %v343 = vpop.f32.mrf.mxu0
        %v344 = vadd.f32 %v267, %v343
        %345 = vmatmul.f32.gmra.mxu0 %v289
        %v346 = vpop.f32.mrf.mxu0
        %v347 = vadd.f32 %v272, %v346
        %348 = vmatmul.f32.gmra.mxu0 %v292
        %v349 = vpop.f32.mrf.mxu0
        %v350 = vadd.f32 %v277, %v349
        %351 = vmatmul.f32.gmra.mxu0 %v295
        %v352 = vpop.f32.mrf.mxu0
        %v353 = vadd.f32 %v282, %v352
        %354 = vdwg.mxu0
        %v355 = vmax.f32 %v315, 0.0
        %v356 = vmax.f32 %v344, 0.0
        %v357 = vmax.f32 %v318, 0.0
        %v358 = vmax.f32 %v347, 0.0
        %v359 = vmax.f32 %v321, 0.0
        %v360 = vmax.f32 %v350, 0.0
        %v361 = vmax.f32 %v324, 0.0
        %v362 = vmax.f32 %v353, 0.0
        %v363 = vld [vmem:[%s3] sm:$0xff]
        %v364 = vld [vmem:[%s3 + $0x8] sm:$0xff]
        %v365 = vld [vmem:[%s3 + $0x10] sm:$0xff]
        %v366 = vld [vmem:[%s3 + $0x18] sm:$0xff]
        %v367 = vld [vmem:[%s3 + $0x20] sm:$0xff]
        %v368 = vld [vmem:[%s3 + $0x28] sm:$0xff]
        %v369 = vld [vmem:[%s3 + $0x30] sm:$0xff]
        %v370 = vld [vmem:[%s3 + $0x38] sm:$0xff]
        %v371 = vld [vmem:[%s4] sm:$0xff]
        %v372 = vld [vmem:[%s4 + $0x8] sm:$0xff]
        %v373 = vld [vmem:[%s4 + $0x10] sm:$0xff]
        %v374 = vld [vmem:[%s4 + $0x18] sm:$0xff]
        %v375 = vld [vmem:[%s4 + $0x20] sm:$0xff]
        %v376 = vld [vmem:[%s4 + $0x28] sm:$0xff]
        %v377 = vld [vmem:[%s4 + $0x30] sm:$0xff]
        %v378 = vld [vmem:[%s4 + $0x38] sm:$0xff]
        %380 = vset.pattern.permute.xlu0 0
        %381 = vperm.xlu0 %380, %v371
        %v382 = vpop.permute.xlu0 %381
        %385 = vset.pattern.permute.xlu0 0
        %386 = vperm.xlu0 %385, %v372
        %v387 = vpop.permute.xlu0 %386
        %390 = vset.pattern.permute.xlu0 0
        %391 = vperm.xlu0 %390, %v373
        %v392 = vpop.permute.xlu0 %391
        %395 = vset.pattern.permute.xlu0 0
        %396 = vperm.xlu0 %395, %v374
        %v397 = vpop.permute.xlu0 %396
        %400 = vset.pattern.permute.xlu0 0
        %401 = vperm.xlu0 %400, %v375
        %v402 = vpop.permute.xlu0 %401
        %405 = vset.pattern.permute.xlu0 0
        %406 = vperm.xlu0 %405, %v376
        %v407 = vpop.permute.xlu0 %406
        %410 = vset.pattern.permute.xlu0 0
        %411 = vperm.xlu0 %410, %v377
        %v412 = vpop.permute.xlu0 %411
        %415 = vset.pattern.permute.xlu0 0
        %416 = vperm.xlu0 %415, %v378
        %v417 = vpop.permute.xlu0 %416
        %vm419 = vcmask 261120
        %v421 = vsel %vm419, %v363, 0
        %v424 = vsel %vm419, %v364, 0
        %v427 = vsel %vm419, %v365, 0
        %v430 = vsel %vm419, %v366, 0
        %v433 = vsel %vm419, %v367, 0
        %v436 = vsel %vm419, %v368, 0
        %v439 = vsel %vm419, %v369, 0
        %v442 = vsel %vm419, %v370, 0
        %444 = vmatpush.msra.mxu0 0.0
        %445 = vmatpush.msra.mxu0 0.0
        %446 = vmatpush.msra.mxu0 0.0
        %447 = vmatpush.msra.mxu0 0.0
        %448 = vmatpush.msra.mxu0 0.0
        %449 = vmatpush.msra.mxu0 0.0
        %450 = vmatpush.msra.mxu0 0.0
        %451 = vmatpush.msra.mxu0 0.0
        %452 = vmatpush.msra.mxu0 0.0
        %453 = vmatpush.msra.mxu0 0.0
        %454 = vmatpush.msra.mxu0 0.0
        %455 = vmatpush.msra.mxu0 0.0
        %456 = vmatpush.msra.mxu0 %v361
        %457 = vmatpush.msra.mxu0 %v359
        %458 = vmatpush.msra.mxu0 %v357
        %459 = vmatpush.msra.mxu0 %v355
        %460 = vmatmul.f32.gmra.mxu0 %v421
        %v461 = vpop.f32.mrf.mxu0
        %v462 = vadd.f32 %v382, %v461
        %463 = vmatmul.f32.gmra.mxu0 %v424
        %v464 = vpop.f32.mrf.mxu0
        %v465 = vadd.f32 %v387, %v464
        %466 = vmatmul.f32.gmra.mxu0 %v427
        %v467 = vpop.f32.mrf.mxu0
        %v468 = vadd.f32 %v392, %v467
        %469 = vmatmul.f32.gmra.mxu0 %v430
        %v470 = vpop.f32.mrf.mxu0
        %v471 = vadd.f32 %v397, %v470
        %472 = vmatmul.f32.gmra.mxu0 %v433
        %v473 = vpop.f32.mrf.mxu0
        %v474 = vadd.f32 %v402, %v473
        %475 = vmatmul.f32.gmra.mxu0 %v436
        %v476 = vpop.f32.mrf.mxu0
        %v477 = vadd.f32 %v407, %v476
        %478 = vmatmul.f32.gmra.mxu0 %v439
        %v479 = vpop.f32.mrf.mxu0
        %v480 = vadd.f32 %v412, %v479
        %481 = vmatmul.f32.gmra.mxu0 %v442
        %v482 = vpop.f32.mrf.mxu0
        %v483 = vadd.f32 %v417, %v482
        %484 = vdwg.mxu0
        %485 = vmatpush.msra.mxu0 0.0
        %486 = vmatpush.msra.mxu0 0.0
        %487 = vmatpush.msra.mxu0 0.0
        %488 = vmatpush.msra.mxu0 0.0
        %489 = vmatpush.msra.mxu0 0.0
        %490 = vmatpush.msra.mxu0 0.0
        %491 = vmatpush.msra.mxu0 0.0
        %492 = vmatpush.msra.mxu0 0.0
        %493 = vmatpush.msra.mxu0 0.0
        %494 = vmatpush.msra.mxu0 0.0
        %495 = vmatpush.msra.mxu0 0.0
        %496 = vmatpush.msra.mxu0 0.0
        %497 = vmatpush.msra.mxu0 %v362
        %498 = vmatpush.msra.mxu0 %v360
        %499 = vmatpush.msra.mxu0 %v358
        %500 = vmatpush.msra.mxu0 %v356
        %501 = vmatmul.f32.gmra.mxu0 %v421
        %v502 = vpop.f32.mrf.mxu0
        %v503 = vadd.f32 %v382, %v502
        %504 = vmatmul.f32.gmra.mxu0 %v424
        %v505 = vpop.f32.mrf.mxu0
        %v506 = vadd.f32 %v387, %v505
        %507 = vmatmul.f32.gmra.mxu0 %v427
        %v508 = vpop.f32.mrf.mxu0
        %v509 = vadd.f32 %v392, %v508
        %510 = vmatmul.f32.gmra.mxu0 %v430
        %v511 = vpop.f32.mrf.mxu0
        %v512 = vadd.f32 %v397, %v511
        %513 = vmatmul.f32.gmra.mxu0 %v433
        %v514 = vpop.f32.mrf.mxu0
        %v515 = vadd.f32 %v402, %v514
        %516 = vmatmul.f32.gmra.mxu0 %v436
        %v517 = vpop.f32.mrf.mxu0
        %v518 = vadd.f32 %v407, %v517
        %519 = vmatmul.f32.gmra.mxu0 %v439
        %v520 = vpop.f32.mrf.mxu0
        %v521 = vadd.f32 %v412, %v520
        %522 = vmatmul.f32.gmra.mxu0 %v442
        %v523 = vpop.f32.mrf.mxu0
        %v524 = vadd.f32 %v417, %v523
        %525 = vdwg.mxu0
        %v526 = vmax.f32 %v462, 0.0
        %v527 = vmax.f32 %v503, 0.0
        %v528 = vmax.f32 %v465, 0.0
        %v529 = vmax.f32 %v506, 0.0
        %v530 = vmax.f32 %v468, 0.0
        %v531 = vmax.f32 %v509, 0.0
        %v532 = vmax.f32 %v471, 0.0
        %v533 = vmax.f32 %v512, 0.0
        %v534 = vmax.f32 %v474, 0.0
        %v535 = vmax.f32 %v515, 0.0
        %v536 = vmax.f32 %v477, 0.0
        %v537 = vmax.f32 %v518, 0.0
        %v538 = vmax.f32 %v480, 0.0
        %v539 = vmax.f32 %v521, 0.0
        %v540 = vmax.f32 %v483, 0.0
        %v541 = vmax.f32 %v524, 0.0
        %542 = vst [vmem:[%s242] sm:$0xff] %v526
        %543 = vst [vmem:[%s242 + $0x8] sm:$0xff] %v527
        %544 = vst [vmem:[%s242 + $0x10] sm:$0xff] %v528
        %545 = vst [vmem:[%s242 + $0x18] sm:$0xff] %v529
        %546 = vst [vmem:[%s242 + $0x20] sm:$0xff] %v530
        %547 = vst [vmem:[%s242 + $0x28] sm:$0xff] %v531
        %548 = vst [vmem:[%s242 + $0x30] sm:$0xff] %v532
        %549 = vst [vmem:[%s242 + $0x38] sm:$0xff] %v533
        %550 = vst [vmem:[%s242 + $0x40] sm:$0xff] %v534
        %551 = vst [vmem:[%s242 + $0x48] sm:$0xff] %v535
        %552 = vst [vmem:[%s242 + $0x50] sm:$0xff] %v536
        %553 = vst [vmem:[%s242 + $0x58] sm:$0xff] %v537
        %554 = vst [vmem:[%s242 + $0x60] sm:$0xff] %v538
        %555 = vst [vmem:[%s242 + $0x68] sm:$0xff] %v539
        %556 = vst [vmem:[%s242 + $0x70] sm:$0xff] %v540
        %557 = vst [vmem:[%s242 + $0x78] sm:$0xff] %v541
        %s558 = sand.u32 %s153, 1
        %s559 = scalar_lea.sflag [#allocation3], %s558
        %s560 = sand.u32 %s153, 1
        %s561 = smul.addr %s560, 128
        %s562 = scalar_lea.vmem [#allocation2], %s561
        // Predicated region
        $region41: #{tpu_custom_call.1} parent=39 // pred_check
          %p563 = pneg %p163
        $region42: #{tpu_custom_call.1} parent=39 // pred_check_branch
          %565 = sbr.rel (%p563) target = $region44
        $region43: #{tpu_custom_call.1} parent=39 // pred_region
          %s566 = smul.u32 2, %s24
          %568 = vsyncadd %s559, 0
          %s569 = smul.addr %s23, 16
          %s570 = sadd.s32 %s566, %s569
          %s571 = smul.addr %s570, 8
          %s572 = scalar_lea.hbm %s5, %s571
          %s573 = sshll.u32 %s562, 4
          %s574 = int_to_ptr.vmem [resolvable:$true] %s573
          %s575 = sshll.u32 %s572, 4
          %s576 = int_to_ptr.hbm [resolvable:$true] %s575
          %581 = dma.vmem_to_hbm [thread:$0]  %s574, 2048, %s576, %s559, 256, 256, 16
        $region44: #{tpu_custom_call.1} parent=39 // pred_fallthru
          _
      $region40: #{tpu_custom_call.1} parent=5 // pred_fallthru
        _
      %p582 = scmp.le.s32.totalorder 2, %s14
      // Predicated region
      $region45: #{tpu_custom_call.1} parent=5 // pred_check
        %p583 = pneg %p582
      $region46: #{tpu_custom_call.1} parent=5 // pred_check_branch
        %585 = sbr.rel (%p583) target = $region48
      $region47: #{tpu_custom_call.1} parent=5 // pred_region
        %s586 = ssub.s32 %s14, 2
        // Predicated region
        $region49: #{tpu_custom_call.1} parent=47 // pred_check
          %p587 = pneg %p169
        $region50: #{tpu_custom_call.1} parent=47 // pred_check_branch
          %589 = sbr.rel (%p587) target = $region52
        $region51: #{tpu_custom_call.1} parent=47 // pred_region
          %s590 = sand.u32 %s154, 1
          %s591 = scalar_lea.sflag [#allocation3], %s590
          %s592 = sand.u32 %s154, 1
          %s593 = smul.addr %s592, 128
          %s594 = scalar_lea.vmem [#allocation2], %s593
          %596 = dma.done %s591, 2048
        $region52: #{tpu_custom_call.1} parent=47 // pred_fallthru
          _
      $region48: #{tpu_custom_call.1} parent=5 // pred_fallthru
        _
    $region6: #{tpu_custom_call.1} parent=1 // loop_footer
      %s18 = sadd.s32 1, %s14
    $region7: #{tpu_custom_call.1} parent=1 // loop_footer_branch
      %13 = sbr.rel target = $region3
    $region8: #{tpu_custom_call.1} parent=1 // loop_exit
      _
    %597 = vsyncpa [#allocation3], 1
    %s598 = scalar_lea.sflag [#allocation3], 1
    %599 = vsyncpa %s598, 1

</llo_original>
